<compile_context>
chip_gen: v5e
topology: v5e:2x2
jax: 0.10.0
libtpu: 0.0.40
codegen_flags: <defaults>
</compile_context>

<pallas_src>
import functools

import jax
import jax.numpy as jnp
from jax import lax
from jax.experimental import pallas as pl
from jax.experimental.pallas import tpu as pltpu


def _rmse_sums_kernel(pred_ref, tgt_ref, acc_ref, *, m_rows, block_rows):
    """Grid axis 0 walks (block_rows, 128) slabs of the (M, 128) flat views.

    acc_ref: (1, 128) f32 output block, resident across the whole grid, holding
             per-lane sums of squared error (lane parity encodes the channel).
    """
    step = pl.program_id(0)

    @pl.when(step == 0)
    def _init():
        acc_ref[...] = jnp.zeros_like(acc_ref)

    # Cast in-kernel (VPU) so bf16/f16 inputs need no wrapper-side up-cast.
    diff = pred_ref[...].astype(jnp.float32) - tgt_ref[...].astype(jnp.float32)
    rows_left = m_rows - step * block_rows  # valid rows in this block

    @pl.when(rows_left >= block_rows)
    def _full_block():
        acc_ref[...] += jnp.sum(diff * diff, axis=0, keepdims=True)

    @pl.when(rows_left < block_rows)
    def _ragged_tail():
        # Mask BEFORE squaring: OOB rows of the last block hold unspecified
        # data (possibly Inf/NaN) and must not reach the accumulator.
        row = lax.broadcasted_iota(jnp.int32, diff.shape, 0)
        d = jnp.where(row < rows_left, diff, 0.0)
        acc_ref[...] += jnp.sum(d * d, axis=0, keepdims=True)


def _finalize(sum_lin, sum_ang, n):
    eps = jnp.float32(1e-6)
    sum_all = sum_lin + sum_ang
    loss = jnp.sqrt(sum_all / jnp.float32(2 * n) + eps)
    loss_linear = jnp.sqrt(sum_lin / jnp.float32(n) + eps)
    loss_angular = jnp.sqrt(sum_ang / jnp.float32(n) + eps)
    return loss, loss_linear, loss_angular


def rmse_loss(output, target, *, block_rows=4096, min_pallas_rows=4096):
    """Pallas implementation of RMSELoss.forward.

    Returns (loss, loss_linear, loss_angular) as f32 scalars.
    """
    assert output.shape == target.shape
    assert output.ndim == 2 and output.shape[1] == 2, "expects (N, 2) inputs"
    n = output.shape[0]

    # Small-N fast path: custom-call dispatch dominates; let XLA fuse it.
    if n < min_pallas_rows:
        d = output.astype(jnp.float32) - target.astype(jnp.float32)
        d2 = d * d
        return _finalize(jnp.sum(d2[:, 0]), jnp.sum(d2[:, 1]), n)

    total = 2 * n
    pred_flat = output.reshape(total)   # free view of row-major (N, 2)
    tgt_flat = target.reshape(total)

    # Lane-dense (M, 128) view.  Only when 2N is not a multiple of 128 (rare
    # for large batches) do we append <128 zeros to the flat stream; zeros on
    # BOTH operands contribute zero squared error.
    padded = 128 * pl.cdiv(total, 128)
    if padded != total:
        pred_flat = jnp.pad(pred_flat, (0, padded - total))
        tgt_flat = jnp.pad(tgt_flat, (0, padded - total))
    m_rows = padded // 128
    pred2d = pred_flat.reshape(m_rows, 128)
    tgt2d = tgt_flat.reshape(m_rows, 128)

    # Block sizing: (br, 128) per step; br a multiple of 8, or the full extent.
    if m_rows <= block_rows:
        br = m_rows
    else:
        br = max(8, (block_rows // 8) * 8)

    grid = (pl.cdiv(m_rows, br),)
    in_blk = pl.BlockSpec((br, 128), lambda i: (i, 0))

    kernel = functools.partial(_rmse_sums_kernel, m_rows=m_rows, block_rows=br)
    lane_sums = pl.pallas_call(
        kernel,
        out_shape=jax.ShapeDtypeStruct((1, 128), jnp.float32),
        grid_spec=pltpu.PrefetchScalarGridSpec(
            num_scalar_prefetch=0,
            grid=grid,
            in_specs=[in_blk, in_blk],
            out_specs=pl.BlockSpec((1, 128), lambda i: (0, 0)),
        ),
        compiler_params=pltpu.CompilerParams(
            dimension_semantics=("arbitrary",),
        ),
    )(pred2d, tgt2d)

    lane_sums = lane_sums.reshape(128)
    # Flat index f = 2*row + col maps to (r, lane) with f = 128*r + lane, so
    # col == lane % 2 (128 is even): even lanes -> linear, odd -> angular.
    sum_lin = jnp.sum(lane_sums[0::2])
    sum_ang = jnp.sum(lane_sums[1::2])
    return _finalize(sum_lin, sum_ang, n)


def _rmse_ref(output, target):
    eps = 1e-6
    out32 = output.astype(jnp.float32)
    tgt32 = target.astype(jnp.float32)
    mse = lambda a, b: jnp.mean((a - b) ** 2)
    return (
        jnp.sqrt(mse(out32, tgt32) + eps),
        jnp.sqrt(mse(out32[:, 0], tgt32[:, 0]) + eps),
        jnp.sqrt(mse(out32[:, 1], tgt32[:, 1]) + eps),
    )


if __name__ == "__main__":
    key = jax.random.PRNGKey(0)

    def check(n, **kw):
        k1, k2 = jax.random.split(jax.random.fold_in(key, n))
        output = jax.random.normal(k1, (n, 2), dtype=jnp.float32)
        target = jax.random.normal(k2, (n, 2), dtype=jnp.float32)
        got = jax.block_until_ready(rmse_loss(output, target, **kw))
        ref = _rmse_ref(output, target)
        for g, r in zip(got, ref):
            assert jnp.allclose(g, r, atol=1e-5, rtol=1e-5), (n, kw, g, r)

    # Tiny input, Pallas path forced (single (1, 128) block).
    check(8, min_pallas_rows=0)
    # Multi-step grid with a ragged, in-kernel-masked last block:
    # 2*640 = 1280 elems -> 10 rows of 128; block_rows=8 -> 2 steps, 2-row tail.
    check(640, block_rows=8, min_pallas_rows=0)
    # Misaligned N (2N % 128 != 0): minimal flat zero-pad branch.
    check(300, min_pallas_rows=0)
    # Small-N jnp fast path (default threshold).
    check(33)

    print("KERNEL_OK")
</pallas_src>

<mosaic_0001>
module attributes {stable_mosaic.version = 11 : i64} {
  func.func @_rmse_sums_kernel(%arg0: i32, %arg1: memref<1x128xf32, #tpu.memory_space<vmem>>, %arg2: memref<1x128xf32, #tpu.memory_space<vmem>>, %arg3: memref<1x128xf32, #tpu.memory_space<vmem>>) attributes {dimension_semantics = [#tpu.dimension_semantics<arbitrary>], iteration_bounds = array<i64: 1>, scalar_prefetch = 0 : i64, scratch_operands = 0 : i64, tpu.core_type = #tpu.core_type<tc>, window_params = [{transform_indices = @transform_0, window_bounds = array<i64: 1, 128>}, {transform_indices = @transform_1, window_bounds = array<i64: 1, 128>}, {pipeline_mode = #tpu.pipeline_mode<synchronous>, transform_indices = @transform_2, window_bounds = array<i64: 1, 128>}]} {
    %c0_i32 = arith.constant 0 : i32
    %0 = arith.cmpi eq, %arg0, %c0_i32 : i32
    %1 = arith.extui %0 : i1 to i32
    %c0_i32_0 = arith.constant 0 : i32
    %2 = arith.cmpi ne, %1, %c0_i32_0 : i32
    scf.if %2 {
      %cst = arith.constant 0.000000e+00 : f32
      %14 = vector.broadcast %cst : f32 to vector<1x128xf32>
      %c0_9 = arith.constant 0 : index
      %c0_10 = arith.constant 0 : index
      %15 = vector.load %arg3[%c0_9, %c0_10] : memref<1x128xf32, #tpu.memory_space<vmem>>, vector<1x128xf32>
      tpu.vector_store %arg3[%c0_9, %c0_10], %14 {strides = array<i32>} : memref<1x128xf32, #tpu.memory_space<vmem>>, vector<1x128xf32>,
    } else {
    }
    %c0 = arith.constant 0 : index
    %c0_1 = arith.constant 0 : index
    %3 = vector.load %arg1[%c0, %c0_1] : memref<1x128xf32, #tpu.memory_space<vmem>>, vector<1x128xf32>
    %c0_2 = arith.constant 0 : index
    %c0_3 = arith.constant 0 : index
    %4 = vector.load %arg2[%c0_2, %c0_3] : memref<1x128xf32, #tpu.memory_space<vmem>>, vector<1x128xf32>
    %5 = arith.subf %3, %4 : vector<1x128xf32>
    %c1_i32 = arith.constant 1 : i32
    %6 = arith.muli %arg0, %c1_i32 : i32
    %c1_i32_4 = arith.constant 1 : i32
    %7 = arith.subi %c1_i32_4, %6 : i32
    %c1_i32_5 = arith.constant 1 : i32
    %8 = arith.cmpi sge, %7, %c1_i32_5 : i32
    %9 = arith.extui %8 : i1 to i32
    %c0_i32_6 = arith.constant 0 : i32
    %10 = arith.cmpi ne, %9, %c0_i32_6 : i32
    scf.if %10 {
      %c0_9 = arith.constant 0 : index
      %c0_10 = arith.constant 0 : index
      %14 = vector.load %arg3[%c0_9, %c0_10] : memref<1x128xf32, #tpu.memory_space<vmem>>, vector<1x128xf32>
      %15 = arith.mulf %5, %5 : vector<1x128xf32>
      %cst = arith.constant dense<0.000000e+00> : vector<128xf32>
      %16 = vector.multi_reduction <add>, %15, %cst [0] : vector<1x128xf32> to vector<128xf32>
      %17 = vector.shape_cast %16 : vector<128xf32> to vector<1x128xf32>
      %18 = arith.addf %14, %17 : vector<1x128xf32>
      %c0_11 = arith.constant 0 : index
      %c0_12 = arith.constant 0 : index
      %19 = vector.load %arg3[%c0_11, %c0_12] : memref<1x128xf32, #tpu.memory_space<vmem>>, vector<1x128xf32>
      tpu.vector_store %arg3[%c0_11, %c0_12], %18 {strides = array<i32>} : memref<1x128xf32, #tpu.memory_space<vmem>>, vector<1x128xf32>,
    } else {
    }
    %c1_i32_7 = arith.constant 1 : i32
    %11 = arith.cmpi slt, %7, %c1_i32_7 : i32
    %12 = arith.extui %11 : i1 to i32
    %c0_i32_8 = arith.constant 0 : i32
    %13 = arith.cmpi ne, %12, %c0_i32_8 : i32
    scf.if %13 {
      %14 = tpu.iota {dimensions = array<i32: 0>} : vector<1x128xi32>
      %15 = vector.broadcast %7 : i32 to vector<1x128xi32>
      %16 = arith.cmpi slt, %14, %15 : vector<1x128xi32>
      %cst = arith.constant 0.000000e+00 : f32
      %17 = vector.broadcast %cst : f32 to vector<1x128xf32>
      %18 = arith.select %16, %5, %17 : vector<1x128xi1>, vector<1x128xf32>
      %c0_9 = arith.constant 0 : index
      %c0_10 = arith.constant 0 : index
      %19 = vector.load %arg3[%c0_9, %c0_10] : memref<1x128xf32, #tpu.memory_space<vmem>>, vector<1x128xf32>
      %20 = arith.mulf %18, %18 : vector<1x128xf32>
      %cst_11 = arith.constant dense<0.000000e+00> : vector<128xf32>
      %21 = vector.multi_reduction <add>, %20, %cst_11 [0] : vector<1x128xf32> to vector<128xf32>
      %22 = vector.shape_cast %21 : vector<128xf32> to vector<1x128xf32>
      %23 = arith.addf %19, %22 : vector<1x128xf32>
      %c0_12 = arith.constant 0 : index
      %c0_13 = arith.constant 0 : index
      %24 = vector.load %arg3[%c0_12, %c0_13] : memref<1x128xf32, #tpu.memory_space<vmem>>, vector<1x128xf32>
      tpu.vector_store %arg3[%c0_12, %c0_13], %23 {strides = array<i32>} : memref<1x128xf32, #tpu.memory_space<vmem>>, vector<1x128xf32>,
    } else {
    }
    return
  }
  func.func @transform_0(%arg0: i32) -> (i32, i32) {
    %c0_i32 = arith.constant 0 : i32
    %c0_i32_0 = arith.constant 0 : i32
    return %arg0, %c0_i32 : i32, i32
  }
  func.func @transform_1(%arg0: i32) -> (i32, i32) {
    %c0_i32 = arith.constant 0 : i32
    %c0_i32_0 = arith.constant 0 : i32
    return %arg0, %c0_i32 : i32, i32
  }
  func.func @transform_2(%arg0: i32) -> (i32, i32) {
    %c0_i32 = arith.constant 0 : i32
    %c0_i32_0 = arith.constant 0 : i32
    %c0_i32_1 = arith.constant 0 : i32
    return %c0_i32, %c0_i32_0 : i32, i32
  }
}

</mosaic_0001>

<llo_original>
// kernel: tpu_custom_call.1
$region0: #{tpu_custom_call.1}
  #allocation0 [shape = 'u32[]', space=smem, size = 0x4, offset = 0x4, fixed_abs, tag = 'smem constant byte address 0x4 - core index']
  #allocation1 [shape = 'u32[72,128]{1,0:T(1,128)}', space=vmem, size = 0x9000, scoped, tag = 'internal scratch']
  %s0 = inlined_call_operand.hbm [shape: f32[1,128], index: 0, kind: input, shape index: {}]
  %s1 = inlined_call_operand.hbm [shape: f32[1,128], index: 1, kind: input, shape index: {}]
  %s2 = inlined_call_operand.hbm [shape: f32[1,128], index: 2, kind: output, shape index: {}]
  %s3 = sld [smem:[#allocation0]]
  $region38: #{tpu_custom_call.1} parent=0
    _
  %s5 = ssub.s32 1, %s3
  %s6 = scalar_select 0, %s5, %s3
  $region1: #{tpu_custom_call.1} parent=0
    #allocation2 [shape = 'u8[512]{0}', space=vmem, size = 0x400, scoped, tag = 'input window, operand 0, single buffered']
    #allocation3 [shape = 's32[1]{0}', space=sflag, size = 0x4, scoped, tag = 'scoped memory for tpu_custom_call.1']
    #allocation4 [shape = 's32[1]{0}', space=sflag, size = 0x4, scoped, tag = 'scoped memory for tpu_custom_call.1']
    #allocation5 [shape = 'u8[512]{0}', space=vmem, size = 0x400, scoped, tag = 'input window, operand 1, single buffered']
    #allocation6 [shape = 's32[1]{0}', space=sflag, size = 0x4, scoped, tag = 'scoped memory for tpu_custom_call.1']
    #allocation7 [shape = 'u8[512]{0}', space=vmem, size = 0x400, scoped, tag = 'output window, operand 0, single buffered']
    %7 = vsyncpa [#allocation3], 0
    %8 = vsyncpa [#allocation6], 0
    %9 = vsyncpa [#allocation4], 0
    // Predicated region
    $region2: #{tpu_custom_call.1} parent=1 // pred_check
      _
    $region3: #{tpu_custom_call.1} parent=1 // pred_check_branch
      %11 = sbr.rel (0) target = $region5
    $region4: #{tpu_custom_call.1} parent=1 // pred_region
      %13 = vsyncadd [#allocation3], 0
      %s15 = sshll.u32 %s0, 4
      %s16 = int_to_ptr.hbm [resolvable:$true] %s15
      %s17 = sshll.u32 [#allocation2], 4
      %s18 = int_to_ptr.vmem [resolvable:$true] %s17
      %20 = dma.hbm_to_vmem [thread:$0]  %s16, 16, %s18, [#allocation3]
    $region5: #{tpu_custom_call.1} parent=1 // pred_fallthru
      _
    // Predicated region
    $region6: #{tpu_custom_call.1} parent=1 // pred_check
      _
    $region7: #{tpu_custom_call.1} parent=1 // pred_check_branch
      %22 = sbr.rel (0) target = $region9
    $region8: #{tpu_custom_call.1} parent=1 // pred_region
      %24 = vsyncadd [#allocation6], 0
      %s26 = sshll.u32 %s1, 4
      %s27 = int_to_ptr.hbm [resolvable:$true] %s26
      %s28 = sshll.u32 [#allocation5], 4
      %s29 = int_to_ptr.vmem [resolvable:$true] %s28
      %31 = dma.hbm_to_vmem [thread:$0]  %s27, 16, %s29, [#allocation6]
    $region9: #{tpu_custom_call.1} parent=1 // pred_fallthru
      _
    // Predicated region
    $region10: #{tpu_custom_call.1} parent=1 // pred_check
      _
    $region11: #{tpu_custom_call.1} parent=1 // pred_check_branch
      %33 = sbr.rel (0) target = $region13
    $region12: #{tpu_custom_call.1} parent=1 // pred_region
      %35 = dma.done [#allocation3], 16
    $region13: #{tpu_custom_call.1} parent=1 // pred_fallthru
      _
    // Predicated region
    $region14: #{tpu_custom_call.1} parent=1 // pred_check
      _
    $region15: #{tpu_custom_call.1} parent=1 // pred_check_branch
      %37 = sbr.rel (0) target = $region17
    $region16: #{tpu_custom_call.1} parent=1 // pred_region
      %39 = dma.done [#allocation6], 16
    $region17: #{tpu_custom_call.1} parent=1 // pred_fallthru
      _
    %p40 = scmp.eq.s32.totalorder 0, 0
    // Predicated region
    $region18: #{tpu_custom_call.1} parent=1 // pred_check
      %p41 = pneg %p40
    $region19: #{tpu_custom_call.1} parent=1 // pred_check_branch
      %43 = sbr.rel (%p41) target = $region21
    $region20: #{tpu_custom_call.1} parent=1 // pred_region
      %44 = vst [vmem:[#allocation7] sm:$0x1] 0.0
    $region21: #{tpu_custom_call.1} parent=1 // pred_fallthru
      _
    %v45 = vld [vmem:[#allocation2] sm:$0x1]
    %v46 = vld [vmem:[#allocation5] sm:$0x1]
    %v47 = vsub.f32 %v45, %v46
    %s48 = ssub.s32 1, 0
    %p49 = scmp.ge.s32.totalorder %s48, 1
    // Predicated region
    $region22: #{tpu_custom_call.1} parent=1 // pred_check
      %p50 = pneg %p49
    $region23: #{tpu_custom_call.1} parent=1 // pred_check_branch
      %52 = sbr.rel (%p50) target = $region25
    $region24: #{tpu_custom_call.1} parent=1 // pred_region
      %v53 = vld [vmem:[#allocation7] sm:$0x1]
      %v54 = vmul.f32 %v47, %v47
      %v55 = vadd.f32 %v54, 0.0
      %v56 = vadd.f32 %v53, %v55
      %57 = vst [vmem:[#allocation7] sm:$0x1] %v56
    $region25: #{tpu_custom_call.1} parent=1 // pred_fallthru
      _
    %p58 = scmp.lt.s32.totalorder %s48, 1
    // Predicated region
    $region26: #{tpu_custom_call.1} parent=1 // pred_check
      %p59 = pneg %p58
    $region27: #{tpu_custom_call.1} parent=1 // pred_check_branch
      %61 = sbr.rel (%p59) target = $region29
    $region28: #{tpu_custom_call.1} parent=1 // pred_region
      %v62 = vlaneseq
      %v63 = vshrl.u32 %v62, 7
      %v64 = vstv %s48
      %vm65 = vcmp.lt.s32.totalorder %v63, %v64
      %v66 = vsel %vm65, %v47, 0.0
      %v67 = vld [vmem:[#allocation7] sm:$0x1]
      %v68 = vmul.f32 %v66, %v66
      %v69 = vadd.f32 %v68, 0.0
      %v70 = vadd.f32 %v67, %v69
      %71 = vst [vmem:[#allocation7] sm:$0x1] %v70
    $region29: #{tpu_custom_call.1} parent=1 // pred_fallthru
      _
    // Predicated region
    $region30: #{tpu_custom_call.1} parent=1 // pred_check
      _
    $region31: #{tpu_custom_call.1} parent=1 // pred_check_branch
      %73 = sbr.rel (0) target = $region33
    $region32: #{tpu_custom_call.1} parent=1 // pred_region
      %75 = vsyncadd [#allocation4], 0
      %s77 = sshll.u32 [#allocation7], 4
      %s78 = int_to_ptr.vmem [resolvable:$true] %s77
      %s79 = sshll.u32 %s2, 4
      %s80 = int_to_ptr.hbm [resolvable:$true] %s79
      %82 = dma.vmem_to_hbm [thread:$0]  %s78, 16, %s80, [#allocation4]
    $region33: #{tpu_custom_call.1} parent=1 // pred_fallthru
      _
    // Predicated region
    $region34: #{tpu_custom_call.1} parent=1 // pred_check
      _
    $region35: #{tpu_custom_call.1} parent=1 // pred_check_branch
      %84 = sbr.rel (0) target = $region37
    $region36: #{tpu_custom_call.1} parent=1 // pred_region
      %86 = dma.done [#allocation4], 16
    $region37: #{tpu_custom_call.1} parent=1 // pred_fallthru
      _
    %87 = vsyncpa [#allocation3], 1
    %88 = vsyncpa [#allocation6], 1
    %89 = vsyncpa [#allocation4], 1

</llo_original>
